<compile_context>
chip_gen: v5e
topology: v5e:2x2
jax: 0.10.0
libtpu: 0.0.40
codegen_flags: <defaults>
</compile_context>

<pallas_src>
import functools

import jax
import jax.numpy as jnp
from jax.experimental import pallas as pl
from jax.experimental.pallas import tpu as pltpu


def _make_divisible(v, divisor, min_value=None):
    if min_value is None:
        min_value = divisor
    new_v = max(min_value, int(v + divisor / 2) // divisor * divisor)
    if new_v < 0.9 * v:
        new_v += divisor
    return new_v


# ------------------------------- kernels ------------------------------------


def _se_fused_kernel(x_ref, wr_ref, we_ref, o_ref, *, inv_hw):
    """Single-pass SE: pool + 1x1 convs + hard-sigmoid gate + scale.

    x_ref : (TB, C, HW) native dtype      wr_ref : (C, R) f32
    we_ref: (R, C) f32                    o_ref  : (TB, C, HW)
    """
    x = x_ref[...]

    # Global average pool: f32 accumulation, constant-reciprocal multiply.
    # NOTE: no tail-lane mask is needed here: the block covers the full HW
    # extent, so the kernel's logical array has no out-of-range columns;
    # Mosaic masks the physical pad lanes of the last vreg in the reduction.
    # (The HW-tiled pool kernel below does mask, because its last tile can
    # logically extend past HW.)
    pooled = jnp.sum(x.astype(jnp.float32), axis=-1) * inv_hw      # (TB, C)

    # conv_reduce (1x1, no bias) + ReLU : (TB, C) @ (C, R) -> (TB, R)
    h = jnp.maximum(
        jnp.dot(pooled, wr_ref[...], preferred_element_type=jnp.float32), 0.0)
    # conv_expand (1x1, no bias) : (TB, R) @ (R, C) -> (TB, C)
    s = jnp.dot(h, we_ref[...], preferred_element_type=jnp.float32)

    # hard_sigmoid gate = relu6(s + 3) / 6; scale input in native dtype.
    gate = jnp.clip(s + 3.0, 0.0, 6.0) * (1.0 / 6.0)
    o_ref[...] = (x * gate[:, :, None].astype(x.dtype)).astype(o_ref.dtype)


def _se_pool_gate_kernel(x_ref, wr_ref, we_ref, gate_ref, acc_ref, *,
                         inv_hw, hw_total, thw, needs_mask):
    """Two-pass path, pass 1: HW-tiled pooled sum + gate finalize.

    Grid = (batch, hw_tiles); gate_ref block stays resident across the hw
    ('arbitrary') axis; acc_ref is a (1, C) f32 scratch accumulator.
    """
    hw_i = pl.program_id(1)

    @pl.when(hw_i == 0)
    def _():
        acc_ref[...] = jnp.zeros_like(acc_ref)

    x = x_ref[...].astype(jnp.float32)                       # (1, C, THW)
    if needs_mask:
        # Last tile may logically extend past HW; zero those columns.
        col = jax.lax.broadcasted_iota(jnp.int32, x.shape, 2) + hw_i * thw
        x = jnp.where(col < hw_total, x, 0.0)
    acc_ref[...] += jnp.sum(x, axis=-1)                      # (1, C) f32

    @pl.when(hw_i == pl.num_programs(1) - 1)
    def _():
        pooled = acc_ref[...] * inv_hw
        h = jnp.maximum(
            jnp.dot(pooled, wr_ref[...], preferred_element_type=jnp.float32),
            0.0)
        s = jnp.dot(h, we_ref[...], preferred_element_type=jnp.float32)
        gate = jnp.clip(s + 3.0, 0.0, 6.0) * (1.0 / 6.0)
        gate_ref[...] = gate[:, :, None]                     # (1, C, 1) f32


def _se_scale_kernel(x_ref, gate_ref, o_ref):
    """Two-pass path, pass 2: out = x * gate (gate broadcast over HW tile)."""
    x = x_ref[...]                                           # (1, C, THW)
    g = gate_ref[...].astype(x.dtype)                        # (1, C, 1)
    o_ref[...] = (x * g).astype(o_ref.dtype)


# ------------------------------- wrapper -------------------------------------


def _vmem_budget_and_limit():
    """Per-generation VMEM sizing (v5e/v6e: 128 MiB per core; v7x: 64 MiB)."""
    cap = 128 << 20
    try:
        cap = int(getattr(pltpu.get_tpu_info(), "vmem_capacity_bytes", cap))
    except Exception:
        pass
    if cap >= (96 << 20):              # v5e / v6e: big blocks, big limit
        budget = 64 << 20
        ceiling = min(cap - (32 << 20), 100 << 20)
    else:                              # v7x: 64 MiB per TensorCore
        budget = max(8 << 20, (cap * 3) // 8)    # ~24 MiB
        ceiling = max(24 << 20, (cap * 3) // 4)  # ~48 MiB
    return budget, ceiling


def _clamp_limit(needed, ceiling):
    return int(min(ceiling, max(16 << 20, needed + (2 << 20))))


def _pick_tb(batch, tb_max):
    """Batch block <= tb_max minimizing padded-batch waste (prefer divisors)."""
    tb_max = int(max(1, min(batch, tb_max)))
    best_div = 1
    for tb in range(tb_max, 0, -1):
        if batch % tb == 0:
            best_div = tb
            break
    if best_div >= max(1, tb_max // 2):
        return best_div
    # Allow a larger non-divisor block only if it wastes < 10% padded rows.
    for tb in range(tb_max, best_div, -1):
        bp = pl.cdiv(batch, tb) * tb
        if (bp - batch) / bp < 0.10:
            return tb
    return best_div


def squeeze_excite(x_nchw, w_reduce, w_expand, *, vmem_budget_bytes=None,
                   min_steps=4):
    """SqueezeExcite forward. x:(B,C,H,W), w_reduce:(R,C), w_expand:(C,R)."""
    B, C, H, W = x_nchw.shape
    R = w_reduce.shape[0]
    HW = H * W
    dtype = x_nchw.dtype
    itemsize = jnp.dtype(dtype).itemsize

    budget, ceiling = _vmem_budget_and_limit()
    if vmem_budget_bytes is not None:
        budget = int(vmem_budget_bytes)

    # Tiny 1x1-conv weights: transpose + cast to f32 once in the wrapper so
    # the kernels use plain contractions with no per-step casts/transposes.
    wr_t = w_reduce.T.astype(jnp.float32)      # (C, R)
    we_t = w_expand.T.astype(jnp.float32)      # (R, C)
    w_bytes = 4 * (wr_t.size + we_t.size)

    x_flat = x_nchw.reshape(B, C, HW)          # contiguous reshape, no copy
    slab_bytes = C * HW * itemsize
    f32_tmp = C * HW * 4 if itemsize < 4 else 0      # pooled-cast temporary
    per_img = 4 * slab_bytes + f32_tmp               # 2x-buffered in + out

    if per_img + 4 * w_bytes <= budget:
        # ----- single-pass fused kernel: read x once, write out once -------
        tb_vmem = max(1, budget // per_img)
        tb_steps = max(1, B // min_steps)      # keep >= ~4 grid steps so the
        TB = _pick_tb(B, min(tb_vmem, tb_steps))   # pipeline (and both v7x
        Bp = pl.cdiv(B, TB) * TB                   # TensorCores) stay busy
        if Bp != B:
            x_flat = jnp.pad(x_flat, ((0, Bp - B), (0, 0), (0, 0)))

        out_flat = pl.pallas_call(
            functools.partial(_se_fused_kernel, inv_hw=1.0 / float(HW)),
            out_shape=jax.ShapeDtypeStruct((Bp, C, HW), dtype),
            grid_spec=pltpu.PrefetchScalarGridSpec(
                num_scalar_prefetch=0,
                grid=(Bp // TB,),
                in_specs=[
                    pl.BlockSpec((TB, C, HW), lambda b: (b, 0, 0)),
                    pl.BlockSpec((C, R), lambda b: (0, 0)),
                    pl.BlockSpec((R, C), lambda b: (0, 0)),
                ],
                out_specs=pl.BlockSpec((TB, C, HW), lambda b: (b, 0, 0)),
            ),
            compiler_params=pltpu.CompilerParams(
                dimension_semantics=("parallel",),
                vmem_limit_bytes=_clamp_limit(TB * per_img + 4 * w_bytes,
                                              ceiling)),
        )(x_flat, wr_t, we_t)
        if Bp != B:
            out_flat = out_flat[:B]
        return out_flat.reshape(B, C, H, W)

    # ----- two-pass HW-tiled fallback (slab too big to double-buffer) ------
    col_bytes = C * max(itemsize, 4)
    THW = max(128, (budget // (6 * col_bytes)) // 128 * 128)
    THW = int(min(THW, HW))                    # ==HW is exempt from 128-rule
    n_hw = pl.cdiv(HW, THW)
    needs_mask = (HW % THW) != 0

    gate = pl.pallas_call(
        functools.partial(_se_pool_gate_kernel, inv_hw=1.0 / float(HW),
                          hw_total=HW, thw=THW, needs_mask=needs_mask),
        out_shape=jax.ShapeDtypeStruct((B, C, 1), jnp.float32),
        grid_spec=pltpu.PrefetchScalarGridSpec(
            num_scalar_prefetch=0,
            grid=(B, n_hw),
            in_specs=[
                pl.BlockSpec((1, C, THW), lambda b, h: (b, 0, h)),
                pl.BlockSpec((C, R), lambda b, h: (0, 0)),
                pl.BlockSpec((R, C), lambda b, h: (0, 0)),
            ],
            out_specs=pl.BlockSpec((1, C, 1), lambda b, h: (b, 0, 0)),
            scratch_shapes=[pltpu.VMEM((1, C), jnp.float32)],
        ),
        compiler_params=pltpu.CompilerParams(
            dimension_semantics=("parallel", "arbitrary"),
            vmem_limit_bytes=_clamp_limit(
                2 * C * THW * itemsize + C * THW * 4 + 4 * w_bytes, ceiling)),
    )(x_flat, wr_t, we_t)

    out_flat = pl.pallas_call(
        _se_scale_kernel,
        out_shape=jax.ShapeDtypeStruct((B, C, HW), dtype),
        grid_spec=pltpu.PrefetchScalarGridSpec(
            num_scalar_prefetch=0,
            grid=(B, n_hw),
            in_specs=[
                pl.BlockSpec((1, C, THW), lambda b, h: (b, 0, h)),
                pl.BlockSpec((1, C, 1), lambda b, h: (b, 0, 0)),
            ],
            out_specs=pl.BlockSpec((1, C, THW), lambda b, h: (b, 0, h)),
        ),
        compiler_params=pltpu.CompilerParams(
            dimension_semantics=("parallel", "parallel"),
            vmem_limit_bytes=_clamp_limit(4 * C * THW * itemsize + (1 << 20),
                                          ceiling)),
    )(x_flat, gate)

    return out_flat.reshape(B, C, H, W)


def reference_se(x, w_reduce, w_expand):
    pooled = jnp.mean(x, axis=(2, 3))                    # (B, C)
    h = jnp.maximum(pooled @ w_reduce.T, 0.0)            # (B, R)
    s = h @ w_expand.T                                   # (B, C)
    gate = jnp.clip(s + 3.0, 0.0, 6.0) / 6.0
    return x * gate[:, :, None, None]


if __name__ == "__main__":
    keys = jax.random.split(jax.random.PRNGKey(0), 6)
    se_ratio, divisor = 0.25, 4

    # Case 1: module-sized shapes; H*W is a multiple of 128.
    B, C, H, W = 2, 4, 16, 16
    R = _make_divisible(C * se_ratio, divisor)           # -> 4
    x = jax.random.normal(keys[0], (B, C, H, W), dtype=jnp.float32)
    w_reduce = jax.random.normal(keys[1], (R, C), dtype=jnp.float32) * 0.1
    w_expand = jax.random.normal(keys[2], (C, R), dtype=jnp.float32) * 0.1
    ref = reference_se(x, w_reduce, w_expand)

    out = jax.block_until_ready(squeeze_excite(x, w_reduce, w_expand))
    assert jnp.allclose(out, ref, atol=1e-5, rtol=1e-5), "single-pass mismatch"

    # Same inputs through the two-pass HW-tiled fallback (forced via a tiny
    # budget) to exercise the large-slab / small-VMEM (v7x) code path.
    out2 = jax.block_until_ready(
        squeeze_excite(x, w_reduce, w_expand, vmem_budget_bytes=8 * 1024))
    assert jnp.allclose(out2, ref, atol=1e-5, rtol=1e-5), "two-pass mismatch"

    # Case 2: H*W not a multiple of 128 (no wrapper pad; masked tail stores in
    # the fused path, masked partial tile in the two-pass pool).
    B2, C2, H2, W2 = 3, 8, 15, 15
    R2 = _make_divisible(C2 * se_ratio, divisor)         # -> 4
    x2 = jax.random.normal(keys[3], (B2, C2, H2, W2), dtype=jnp.float32)
    wr2 = jax.random.normal(keys[4], (R2, C2), dtype=jnp.float32) * 0.1
    we2 = jax.random.normal(keys[5], (C2, R2), dtype=jnp.float32) * 0.1
    ref2 = reference_se(x2, wr2, we2)

    out3 = jax.block_until_ready(squeeze_excite(x2, wr2, we2))
    assert jnp.allclose(out3, ref2, atol=1e-5, rtol=1e-5), \
        "single-pass (unaligned HW) mismatch"

    out4 = jax.block_until_ready(
        squeeze_excite(x2, wr2, we2, vmem_budget_bytes=8 * 1024))
    assert jnp.allclose(out4, ref2, atol=1e-5, rtol=1e-5), \
        "two-pass (unaligned HW) mismatch"

    print("KERNEL_OK")
</pallas_src>

<mosaic_0001>
module attributes {stable_mosaic.version = 11 : i64} {
  func.func @_se_fused_kernel(%arg0: i32, %arg1: memref<1x4x256xf32, #tpu.memory_space<vmem>>, %arg2: memref<4x4xf32, #tpu.memory_space<vmem>>, %arg3: memref<4x4xf32, #tpu.memory_space<vmem>>, %arg4: memref<1x4x256xf32, #tpu.memory_space<vmem>>) attributes {dimension_semantics = [#tpu.dimension_semantics<parallel>], iteration_bounds = array<i64: 2>, scalar_prefetch = 0 : i64, scratch_operands = 0 : i64, tpu.core_type = #tpu.core_type<tc>, window_params = [{transform_indices = @transform_0, window_bounds = array<i64: 1, 4, 256>}, {pipeline_mode = #tpu.pipeline_mode<synchronous>, transform_indices = @transform_1, window_bounds = array<i64: 4, 4>}, {pipeline_mode = #tpu.pipeline_mode<synchronous>, transform_indices = @transform_2, window_bounds = array<i64: 4, 4>}, {transform_indices = @transform_3, window_bounds = array<i64: 1, 4, 256>}]} {
    %c0 = arith.constant 0 : index
    %c0_0 = arith.constant 0 : index
    %c0_1 = arith.constant 0 : index
    %0 = vector.load %arg1[%c0, %c0_0, %c0_1] : memref<1x4x256xf32, #tpu.memory_space<vmem>>, vector<1x4x256xf32>
    %cst = arith.constant dense<0.000000e+00> : vector<1x4xf32>
    %1 = vector.multi_reduction <add>, %0, %cst [2] : vector<1x4x256xf32> to vector<1x4xf32>
    %cst_2 = arith.constant 3.906250e-03 : f32
    %2 = vector.broadcast %cst_2 : f32 to vector<1x4xf32>
    %3 = arith.mulf %1, %2 : vector<1x4xf32>
    %c0_3 = arith.constant 0 : index
    %c0_4 = arith.constant 0 : index
    %4 = vector.load %arg2[%c0_3, %c0_4] : memref<4x4xf32, #tpu.memory_space<vmem>>, vector<4x4xf32>
    %cst_5 = arith.constant dense<0.000000e+00> : vector<1x4xf32>
    %5 = tpu.matmul %3, %4, %cst_5 {dimension_numbers = #tpu.dot_dimension_numbers<[1], [0], [0], [1], [0, 0, 1, 1], [], []>} : vector<1x4xf32>, vector<4x4xf32>, vector<1x4xf32> -> vector<1x4xf32>
    %cst_6 = arith.constant 0.000000e+00 : f32
    %6 = vector.broadcast %cst_6 : f32 to vector<1x4xf32>
    %7 = arith.maximumf %5, %6 : vector<1x4xf32>
    %c0_7 = arith.constant 0 : index
    %c0_8 = arith.constant 0 : index
    %8 = vector.load %arg3[%c0_7, %c0_8] : memref<4x4xf32, #tpu.memory_space<vmem>>, vector<4x4xf32>
    %cst_9 = arith.constant dense<0.000000e+00> : vector<1x4xf32>
    %9 = tpu.matmul %7, %8, %cst_9 {dimension_numbers = #tpu.dot_dimension_numbers<[1], [0], [0], [1], [0, 0, 1, 1], [], []>} : vector<1x4xf32>, vector<4x4xf32>, vector<1x4xf32> -> vector<1x4xf32>
    %cst_10 = arith.constant 3.000000e+00 : f32
    %10 = vector.broadcast %cst_10 : f32 to vector<1x4xf32>
    %11 = arith.addf %9, %10 : vector<1x4xf32>
    %cst_11 = arith.constant 0.000000e+00 : f32
    %cst_12 = arith.constant 6.000000e+00 : f32
    %12 = vector.broadcast %cst_11 : f32 to vector<1x4xf32>
    %13 = arith.maximumf %12, %11 : vector<1x4xf32>
    %14 = vector.broadcast %cst_12 : f32 to vector<1x4xf32>
    %15 = arith.minimumf %14, %13 : vector<1x4xf32>
    %cst_13 = arith.constant 0.166666672 : f32
    %16 = vector.broadcast %cst_13 : f32 to vector<1x4xf32>
    %17 = arith.mulf %15, %16 : vector<1x4xf32>
    %18 = vector.shape_cast %17 : vector<1x4xf32> to vector<1x4x1xf32>
    %19 = vector.broadcast %18 : vector<1x4x1xf32> to vector<1x4x256xf32>
    %20 = arith.mulf %0, %19 : vector<1x4x256xf32>
    %c0_14 = arith.constant 0 : index
    %c0_15 = arith.constant 0 : index
    %c0_16 = arith.constant 0 : index
    %21 = vector.load %arg4[%c0_14, %c0_15, %c0_16] : memref<1x4x256xf32, #tpu.memory_space<vmem>>, vector<1x4x256xf32>
    tpu.vector_store %arg4[%c0_14, %c0_15, %c0_16], %20 {strides = array<i32>} : memref<1x4x256xf32, #tpu.memory_space<vmem>>, vector<1x4x256xf32>,
    return
  }
  func.func @transform_0(%arg0: i32) -> (i32, i32, i32) {
    %c0_i32 = arith.constant 0 : i32
    %c0_i32_0 = arith.constant 0 : i32
    %c0_i32_1 = arith.constant 0 : i32
    return %arg0, %c0_i32, %c0_i32_0 : i32, i32, i32
  }
  func.func @transform_1(%arg0: i32) -> (i32, i32) {
    %c0_i32 = arith.constant 0 : i32
    %c0_i32_0 = arith.constant 0 : i32
    %c0_i32_1 = arith.constant 0 : i32
    return %c0_i32, %c0_i32_0 : i32, i32
  }
  func.func @transform_2(%arg0: i32) -> (i32, i32) {
    %c0_i32 = arith.constant 0 : i32
    %c0_i32_0 = arith.constant 0 : i32
    %c0_i32_1 = arith.constant 0 : i32
    return %c0_i32, %c0_i32_0 : i32, i32
  }
  func.func @transform_3(%arg0: i32) -> (i32, i32, i32) {
    %c0_i32 = arith.constant 0 : i32
    %c0_i32_0 = arith.constant 0 : i32
    %c0_i32_1 = arith.constant 0 : i32
    return %arg0, %c0_i32, %c0_i32_0 : i32, i32, i32
  }
}

</mosaic_0001>

<llo_original>
// kernel: tpu_custom_call.1
$region0: #{tpu_custom_call.1}
  #allocation0 [shape = 'u32[]', space=smem, size = 0x4, offset = 0x4, fixed_abs, tag = 'smem constant byte address 0x4 - core index']
  #allocation1 [shape = 'u32[72,128]{1,0:T(1,128)}', space=vmem, size = 0x9000, scoped, tag = 'internal scratch']
  %s0 = inlined_call_operand.hbm [shape: f32[2,4,256], index: 0, kind: input, shape index: {}]
  %s1 = inlined_call_operand.hbm [shape: f32[4,4], index: 1, kind: input, shape index: {}]
  %s2 = inlined_call_operand.hbm [shape: f32[4,4], index: 2, kind: input, shape index: {}]
  %s3 = inlined_call_operand.hbm [shape: f32[2,4,256], index: 3, kind: output, shape index: {}]
  %s4 = sld [smem:[#allocation0]]
  $region57: #{tpu_custom_call.1} parent=0
    _
  %s6 = ssub.s32 1, %s4
  %s7 = scalar_select 0, %s6, %s4
  $region1: #{tpu_custom_call.1} parent=0
    #allocation2 [shape = 'u8[8192]{0}', space=vmem, size = 0x2000, scoped, tag = 'input window, operand 0']
    #allocation3 [shape = 's32[2]{0}', space=sflag, size = 0x8, scoped, tag = 'scoped memory for tpu_custom_call.1']
    #allocation4 [shape = 's32[2]{0}', space=sflag, size = 0x8, scoped, tag = 'scoped memory for tpu_custom_call.1']
    #allocation5 [shape = 'u8[2048]{0}', space=vmem, size = 0x800, scoped, tag = 'input window, operand 1, single buffered']
    #allocation6 [shape = 's32[1]{0}', space=sflag, size = 0x4, scoped, tag = 'scoped memory for tpu_custom_call.1']
    #allocation7 [shape = 'u8[2048]{0}', space=vmem, size = 0x800, scoped, tag = 'input window, operand 2, single buffered']
    #allocation8 [shape = 'u8[8192]{0}', space=vmem, size = 0x2000, scoped, tag = 'output window, operand 0']
    %8 = vsyncpa [#allocation3], 0
    %s9 = scalar_lea.sflag [#allocation3], 1
    %10 = vsyncpa %s9, 0
    %11 = vsyncpa [#allocation6], 0
    %12 = vsyncpa [#allocation4], 0
    %s13 = scalar_lea.sflag [#allocation4], 1
    %14 = vsyncpa %s13, 0
    loop: start=0, step=1, limit=4
    $region2: #{tpu_custom_call.1} parent=1 // loop_pre_header
      _
    $region3: #{tpu_custom_call.1} parent=1 // loop_header
      %s16 = sphi 0, %s20
      %p17 = scmp.ge.s32.totalorder %s16, 4
      %s26 = sphi 0, %s28
      %s29 = sphi 0, %s26
      %s30 = sphi 0, %s29
      %s46 = sphi 0, %s30
      %s50 = sphi 0, %s50
      %s52 = sphi 0, %s50
      %s53 = sphi 0, %s52
      %s67 = sphi 0, %s53
      %s71 = sphi 0, %s71
      %s73 = sphi 0, %s71
      %s74 = sphi 0, %s73
      %s88 = sphi 0, %s74
      %s94 = sphi 0, %s96
      %s97 = sphi 0, %s94
      %s98 = sphi 0, %s97
      %s114 = sphi 0, %s98
    $region4: #{tpu_custom_call.1} parent=1 // loop_header_branch
      %19 = sbr.rel (%p17) target = $region8
    $region5: #{tpu_custom_call.1} parent=1 // loop_body
      %s21 = ssub.s32 %s16, 1
      %s22 = ssub.s32 %s16, 2
      %s23 = sadd.s32 %s16, 1
      %s24 = ssub.s32 %s16, %s23
      %p25 = scmp.eq.s32.totalorder %s24, 0
      %s27 = sadd.s32 %s26, 1
      %s28 = scalar_select %p25, %s26, %s27
      %p31 = pneg %p25
      %p32 = scmp.eq.s32.totalorder %s16, 1
      %p33 = por %p31, %p32
      %p34 = scmp.ne.s32.totalorder %s26, %s29
      %p35 = scmp.eq.s32.totalorder %s16, 0
      %p36 = por %p34, %p35
      %p37 = scmp.ne.s32.totalorder %s26, %s29
      %p38 = scmp.eq.s32.totalorder %s21, 1
      %p39 = por %p37, %p38
      %p40 = scmp.ne.s32.totalorder %s29, %s30
      %p41 = scmp.eq.s32.totalorder %s21, 0
      %p42 = por %p40, %p41
      %p43 = scmp.ne.s32.totalorder %s29, %s30
      %p44 = scmp.eq.s32.totalorder %s22, 1
      %p45 = por %p43, %p44
      %p47 = scmp.ne.s32.totalorder %s30, %s46
      %p48 = scmp.eq.s32.totalorder %s22, 0
      %p49 = por %p47, %p48
      %s51 = sadd.s32 %s50, 1
      %p54 = scmp.eq.s32.totalorder %s16, 1
      %p55 = scmp.ne.s32.totalorder %s50, %s52
      %p56 = scmp.eq.s32.totalorder %s16, 0
      %p57 = por %p55, %p56
      %p58 = scmp.ne.s32.totalorder %s50, %s52
      %p59 = scmp.eq.s32.totalorder %s21, 1
      %p60 = por %p58, %p59
      %p61 = scmp.ne.s32.totalorder %s52, %s53
      %p62 = scmp.eq.s32.totalorder %s21, 0
      %p63 = por %p61, %p62
      %p64 = scmp.ne.s32.totalorder %s52, %s53
      %p65 = scmp.eq.s32.totalorder %s22, 1
      %p66 = por %p64, %p65
      %p68 = scmp.ne.s32.totalorder %s53, %s67
      %p69 = scmp.eq.s32.totalorder %s22, 0
      %p70 = por %p68, %p69
      %s72 = sadd.s32 %s71, 1
      %p75 = scmp.eq.s32.totalorder %s16, 1
      %p76 = scmp.ne.s32.totalorder %s71, %s73
      %p77 = scmp.eq.s32.totalorder %s16, 0
      %p78 = por %p76, %p77
      %p79 = scmp.ne.s32.totalorder %s71, %s73
      %p80 = scmp.eq.s32.totalorder %s21, 1
      %p81 = por %p79, %p80
      %p82 = scmp.ne.s32.totalorder %s73, %s74
      %p83 = scmp.eq.s32.totalorder %s21, 0
      %p84 = por %p82, %p83
      %p85 = scmp.ne.s32.totalorder %s73, %s74
      %p86 = scmp.eq.s32.totalorder %s22, 1
      %p87 = por %p85, %p86
      %p89 = scmp.ne.s32.totalorder %s74, %s88
      %p90 = scmp.eq.s32.totalorder %s22, 0
      %p91 = por %p89, %p90
      %s92 = ssub.s32 %s16, %s23
      %p93 = scmp.eq.s32.totalorder %s92, 0
      %s95 = sadd.s32 %s94, 1
      %s96 = scalar_select %p93, %s94, %s95
      %p99 = pneg %p93
      %p100 = scmp.eq.s32.totalorder %s16, 1
      %p101 = por %p99, %p100
      %p102 = scmp.ne.s32.totalorder %s94, %s97
      %p103 = scmp.eq.s32.totalorder %s16, 0
      %p104 = por %p102, %p103
      %p105 = scmp.ne.s32.totalorder %s94, %s97
      %p106 = scmp.eq.s32.totalorder %s21, 1
      %p107 = por %p105, %p106
      %p108 = scmp.ne.s32.totalorder %s97, %s98
      %p109 = scmp.eq.s32.totalorder %s21, 0
      %p110 = por %p108, %p109
      %p111 = scmp.ne.s32.totalorder %s97, %s98
      %p112 = scmp.eq.s32.totalorder %s22, 1
      %p113 = por %p111, %p112
      %p115 = scmp.ne.s32.totalorder %s98, %s114
      %p116 = scmp.eq.s32.totalorder %s22, 0
      %p117 = por %p115, %p116
      %p118 = scmp.le.s32.totalorder 1, %s16
      %p119 = scmp.lt.s32.totalorder %s16, 3
      %p120 = pnand %p118, %p119
      %p121 = pneg %p120
      // Predicated region
      $region9: #{tpu_custom_call.1} parent=5 // pred_check
        _
      $region10: #{tpu_custom_call.1} parent=5 // pred_check_branch
        %123 = sbr.rel (%p120) target = $region12
      $region11: #{tpu_custom_call.1} parent=5 // pred_region
        %s124 = ssub.s32 %s16, 1
        // Predicated region
        $region13: #{tpu_custom_call.1} parent=11 // pred_check
          %p125 = pneg %p63
        $region14: #{tpu_custom_call.1} parent=11 // pred_check_branch
          %127 = sbr.rel (%p125) target = $region16
        $region15: #{tpu_custom_call.1} parent=11 // pred_region
          %129 = vsyncadd [#allocation6], 0
          %s131 = sshll.u32 %s1, 4
          %s132 = int_to_ptr.hbm [resolvable:$true] %s131
          %s133 = sshll.u32 [#allocation5], 4
          %s134 = int_to_ptr.vmem [resolvable:$true] %s133
          %136 = dma.hbm_to_vmem [thread:$0]  %s132, 64, %s134, [#allocation6]
        $region16: #{tpu_custom_call.1} parent=11 // pred_fallthru
          _
        // Predicated region
        $region17: #{tpu_custom_call.1} parent=11 // pred_check
          %p137 = pneg %p84
        $region18: #{tpu_custom_call.1} parent=11 // pred_check_branch
          %139 = sbr.rel (%p137) target = $region20
        $region19: #{tpu_custom_call.1} parent=11 // pred_region
          %141 = vsyncadd [#allocation6], 0
          %s143 = sshll.u32 %s2, 4
          %s144 = int_to_ptr.hbm [resolvable:$true] %s143
          %s145 = sshll.u32 [#allocation7], 4
          %s146 = int_to_ptr.vmem [resolvable:$true] %s145
          %148 = dma.hbm_to_vmem [thread:$0]  %s144, 64, %s146, [#allocation6]
        $region20: #{tpu_custom_call.1} parent=11 // pred_fallthru
          _
      $region12: #{tpu_custom_call.1} parent=5 // pred_fallthru
        _
      %p149 = scmp.lt.s32.totalorder %s16, 2
      // Predicated region
      $region21: #{tpu_custom_call.1} parent=5 // pred_check
        %p150 = pneg %p149
      $region22: #{tpu_custom_call.1} parent=5 // pred_check_branch
        %152 = sbr.rel (%p150) target = $region24
      $region23: #{tpu_custom_call.1} parent=5 // pred_region
        // Predicated region
        $region25: #{tpu_custom_call.1} parent=23 // pred_check
          %p153 = pneg %p36
        $region26: #{tpu_custom_call.1} parent=23 // pred_check_branch
          %155 = sbr.rel (%p153) target = $region28
        $region27: #{tpu_custom_call.1} parent=23 // pred_region
          %s156 = sand.u32 %s26, 1
          %s157 = scalar_lea.sflag [#allocation3], %s156
          %s158 = sand.u32 %s26, 1
          %s159 = smul.addr %s158, 8
          %s160 = scalar_lea.vmem [#allocation2], %s159
          %162 = vsyncadd %s157, 0
          %s163 = smul.addr %s16, 2
          %s164 = smul.addr %s163, 4
          %s165 = scalar_lea.hbm %s0, %s164
          %s167 = sshll.u32 %s165, 4
          %s168 = int_to_ptr.hbm [resolvable:$true] %s167
          %s169 = sshll.u32 %s160, 4
          %s170 = int_to_ptr.vmem [resolvable:$true] %s169
          %172 = dma.hbm_to_vmem [thread:$0]  %s168, 128, %s170, %s157
        $region28: #{tpu_custom_call.1} parent=23 // pred_fallthru
          _
      $region24: #{tpu_custom_call.1} parent=5 // pred_fallthru
        _
      %p173 = scmp.le.s32.totalorder 1, %s16
      %p174 = scmp.lt.s32.totalorder %s16, 3
      %p175 = pnand %p173, %p174
      %p176 = pneg %p175
      // Predicated region
      $region29: #{tpu_custom_call.1} parent=5 // pred_check
        _
      $region30: #{tpu_custom_call.1} parent=5 // pred_check_branch
        %178 = sbr.rel (%p175) target = $region32
      $region31: #{tpu_custom_call.1} parent=5 // pred_region
        %s179 = ssub.s32 %s16, 1
        %s180 = sand.u32 %s29, 1
        %s181 = scalar_lea.sflag [#allocation3], %s180
        %s182 = sand.u32 %s29, 1
        %s183 = smul.addr %s182, 8
        %s184 = scalar_lea.vmem [#allocation2], %s183
        // Predicated region
        $region33: #{tpu_custom_call.1} parent=31 // pred_check
          %p185 = pneg %p42
        $region34: #{tpu_custom_call.1} parent=31 // pred_check_branch
          %187 = sbr.rel (%p185) target = $region36
        $region35: #{tpu_custom_call.1} parent=31 // pred_region
          %189 = dma.done %s181, 128
        $region36: #{tpu_custom_call.1} parent=31 // pred_fallthru
          _
        // Predicated region
        $region37: #{tpu_custom_call.1} parent=31 // pred_check
          %p190 = pneg %p63
        $region38: #{tpu_custom_call.1} parent=31 // pred_check_branch
          %192 = sbr.rel (%p190) target = $region40
        $region39: #{tpu_custom_call.1} parent=31 // pred_region
          %194 = dma.done [#allocation6], 64
        $region40: #{tpu_custom_call.1} parent=31 // pred_fallthru
          _
        // Predicated region
        $region41: #{tpu_custom_call.1} parent=31 // pred_check
          %p195 = pneg %p84
        $region42: #{tpu_custom_call.1} parent=31 // pred_check_branch
          %197 = sbr.rel (%p195) target = $region44
        $region43: #{tpu_custom_call.1} parent=31 // pred_region
          %199 = dma.done [#allocation6], 64
        $region44: #{tpu_custom_call.1} parent=31 // pred_fallthru
          _
        %s200 = sand.u32 %s29, 1
        %s201 = scalar_lea.sflag [#allocation3], %s200
        %s202 = sand.u32 %s29, 1
        %s203 = smul.addr %s202, 8
        %s204 = scalar_lea.vmem [#allocation2], %s203
        %p205 = pneg %p42
        %p206 = pneg %p39
        %p207 = pneg %p63
        %p208 = pneg %p60
        %p209 = pneg %p84
        %p210 = pneg %p81
        %p211 = pneg %p110
        %p212 = pneg %p107
        %s213 = sand.u32 %s97, 1
        %s214 = scalar_lea.sflag [#allocation4], %s213
        %s215 = sand.u32 %s97, 1
        %s216 = smul.addr %s215, 8
        %s217 = scalar_lea.vmem [#allocation8], %s216
        %v218 = vld [vmem:[%s184] sm:$0xff]
        %220 = vst [vmem:[#allocation1] ss:$2 sm:$0xff] %v218
        %v221 = vld.sshfl [vmem:[#allocation1] sm:$0xff pattern:$0x75316420]
        %v222 = vld.sshfl [vmem:[#allocation1 + $0x8] sm:$0xff pattern:$0x75316420]
        %vm225 = vcmask 1043456
        %v226 = vsel %vm225, %v221, 0.0
        %v227 = vsel %vm225, %v222, 0.0
        %v228 = vadd.f32 %v226, %v227
        %229 = vadd.xlane.f32.xlu0 %v228
        %v230 = vpop.xlane.xlu0 %229
        %v231 = vmul.f32 %v230, 0.00390625
        %v232 = vld [vmem:[#allocation5] sm:$0xf]
        %v234 = vlaneseq
        %v235 = vand.u32 %v234, 127
        %v236 = vperm.slane %v231, %v235
        %vm237 = vcmask 31744
        %v238 = vsel %vm237, %v236, 0
        %v241 = vsel %vm225, %v232, 0
        %243 = vmatpush.msra.mxu0 0.0
        %244 = vmatpush.msra.mxu0 0.0
        %245 = vmatpush.msra.mxu0 0.0
        %246 = vmatpush.msra.mxu0 0.0
        %247 = vmatpush.msra.mxu0 0.0
        %248 = vmatpush.msra.mxu0 0.0
        %249 = vmatpush.msra.mxu0 0.0
        %250 = vmatpush.msra.mxu0 0.0
        %251 = vmatpush.msra.mxu0 0.0
        %252 = vmatpush.msra.mxu0 0.0
        %253 = vmatpush.msra.mxu0 0.0
        %254 = vmatpush.msra.mxu0 0.0
        %255 = vmatpush.msra.mxu0 0.0
        %256 = vmatpush.msra.mxu0 0.0
        %257 = vmatpush.msra.mxu0 0.0
        %258 = vmatpush.msra.mxu0 %v241
        %259 = vmatmul.f32.gmra.mxu0 %v238
        %v260 = vpop.f32.mrf.mxu0
        %v261 = vadd.f32 0.0, %v260
        %262 = vdwg.mxu0
        %v263 = vmax.f32 %v261, 0.0
        %v264 = vld [vmem:[#allocation7] sm:$0xf]
        %v266 = vsel %vm237, %v263, 0
        %v269 = vsel %vm225, %v264, 0
        %271 = vmatpush.msra.mxu0 0.0
        %272 = vmatpush.msra.mxu0 0.0
        %273 = vmatpush.msra.mxu0 0.0
        %274 = vmatpush.msra.mxu0 0.0
        %275 = vmatpush.msra.mxu0 0.0
        %276 = vmatpush.msra.mxu0 0.0
        %277 = vmatpush.msra.mxu0 0.0
        %278 = vmatpush.msra.mxu0 0.0
        %279 = vmatpush.msra.mxu0 0.0
        %280 = vmatpush.msra.mxu0 0.0
        %281 = vmatpush.msra.mxu0 0.0
        %282 = vmatpush.msra.mxu0 0.0
        %283 = vmatpush.msra.mxu0 0.0
        %284 = vmatpush.msra.mxu0 0.0
        %285 = vmatpush.msra.mxu0 0.0
        %286 = vmatpush.msra.mxu0 %v269
        %287 = vmatmul.f32.gmra.mxu0 %v266
        %v288 = vpop.f32.mrf.mxu0
        %v289 = vadd.f32 3.0, %v288
        %290 = vdwg.mxu0
        %v291 = vmax.f32 %v289, 0.0
        %v292 = vmin.f32 %v291, 6.0
        %v293 = vmul.f32 %v292, 0.16666667
        %v294 = vperm.slane %v293, 0
        %v295 = vlaneseq
        %v296 = vshrl.u32 %v295, 7
        %298 = vset.pattern.permute.xlu0 %v296
        %299 = vperm.xlu0 %298, %v294
        %v300 = vpop.permute.xlu0 %299
        %v303 = vunpack.c.l.s4 839922192
        %v304 = vunpack.c.0.s8 %v303
        %v305 = vperm.slane %v300, %v304
        %v307 = vmul.f32 %v218, %v305
        %308 = vst [vmem:[%s217] sm:$0xff] %v307
        %s309 = sand.u32 %s97, 1
        %s310 = scalar_lea.sflag [#allocation4], %s309
        %s311 = sand.u32 %s97, 1
        %s312 = smul.addr %s311, 8
        %s313 = scalar_lea.vmem [#allocation8], %s312
        // Predicated region
        $region45: #{tpu_custom_call.1} parent=31 // pred_check
          %p314 = pneg %p107
        $region46: #{tpu_custom_call.1} parent=31 // pred_check_branch
          %316 = sbr.rel (%p314) target = $region48
        $region47: #{tpu_custom_call.1} parent=31 // pred_region
          %318 = vsyncadd %s310, 0
          %s319 = smul.addr %s21, 2
          %s320 = smul.addr %s319, 4
          %s321 = scalar_lea.hbm %s3, %s320
          %s323 = sshll.u32 %s313, 4
          %s324 = int_to_ptr.vmem [resolvable:$true] %s323
          %s325 = sshll.u32 %s321, 4
          %s326 = int_to_ptr.hbm [resolvable:$true] %s325
          %328 = dma.vmem_to_hbm [thread:$0]  %s324, 128, %s326, %s310
        $region48: #{tpu_custom_call.1} parent=31 // pred_fallthru
          _
      $region32: #{tpu_custom_call.1} parent=5 // pred_fallthru
        _
      %p329 = scmp.le.s32.totalorder 2, %s16
      // Predicated region
      $region49: #{tpu_custom_call.1} parent=5 // pred_check
        %p330 = pneg %p329
      $region50: #{tpu_custom_call.1} parent=5 // pred_check_branch
        %332 = sbr.rel (%p330) target = $region52
      $region51: #{tpu_custom_call.1} parent=5 // pred_region
        %s333 = ssub.s32 %s16, 2
        // Predicated region
        $region53: #{tpu_custom_call.1} parent=51 // pred_check
          %p334 = pneg %p113
        $region54: #{tpu_custom_call.1} parent=51 // pred_check_branch
          %336 = sbr.rel (%p334) target = $region56
        $region55: #{tpu_custom_call.1} parent=51 // pred_region
          %s337 = sand.u32 %s98, 1
          %s338 = scalar_lea.sflag [#allocation4], %s337
          %s339 = sand.u32 %s98, 1
          %s340 = smul.addr %s339, 8
          %s341 = scalar_lea.vmem [#allocation8], %s340
          %343 = dma.done %s338, 128
        $region56: #{tpu_custom_call.1} parent=51 // pred_fallthru
          _
      $region52: #{tpu_custom_call.1} parent=5 // pred_fallthru
        _
    $region6: #{tpu_custom_call.1} parent=1 // loop_footer
      %s20 = sadd.s32 1, %s16
    $region7: #{tpu_custom_call.1} parent=1 // loop_footer_branch
      %15 = sbr.rel target = $region3
    $region8: #{tpu_custom_call.1} parent=1 // loop_exit
      _
    %344 = vsyncpa [#allocation3], 1
    %s345 = scalar_lea.sflag [#allocation3], 1
    %346 = vsyncpa %s345, 1
    %347 = vsyncpa [#allocation6], 1
    %348 = vsyncpa [#allocation4], 1
    %s349 = scalar_lea.sflag [#allocation4], 1
    %350 = vsyncpa %s349, 1

</llo_original>
